<compile_context>
chip_gen: v7x
topology: tpu7x:2x2x1
jax: 0.10.0
libtpu: 0.0.40
codegen_flags: <defaults>
</compile_context>

<pallas_src>
import functools
import math

import jax
import jax.numpy as jnp
from jax import lax
from jax.experimental import pallas as pl
from jax.experimental.pallas import tpu as pltpu

LANE = 128
CHUNK = 512  # lanes of batch processed per inner-loop iteration


def mlp_kernel(xT_ref, w1_ref, b1_ref, w2_ref, b2_ref, oT_ref, *, chunk, n_chunks):
    # xT_ref : (2, B_TILE)  f32   (batch on lanes, tiled over the grid)
    # w1_ref : (64, 2)      f32   (PyTorch nn.Linear layout (out, in); resident)
    # b1_ref : (64, 1)      f32   (resident)
    # w2_ref : (1, 64)      f32   (fc2 weight as a row; resident)
    # b2_ref : (1, 1)       f32   (SMEM scalar)
    # oT_ref : (1, B_TILE)  f32
    w1 = w1_ref[...]
    b1 = b1_ref[...]
    w2 = w2_ref[...]
    b2 = b2_ref[0, 0]

    def body(c, carry):
        start = pl.multiple_of(c * chunk, chunk)
        x_c = xT_ref[:, pl.ds(start, chunk)]                          # (2, chunk)
        # fc1 on the MXU (vector-extended slot); bias + ReLU on the VPU.
        h = jnp.dot(w1, x_c, preferred_element_type=jnp.float32)      # (64, chunk)
        h = jnp.maximum(h + b1, 0.0)
        # fc2 contraction over the 64 hidden units, also on the MXU.
        o = jnp.dot(w2, h, preferred_element_type=jnp.float32) + b2   # (1, chunk)
        oT_ref[:, pl.ds(start, chunk)] = o.astype(oT_ref.dtype)
        return carry

    lax.fori_loop(0, n_chunks, body, 0, unroll=(n_chunks <= 8))


def _choose_b_tile(B, *, max_tile=32768, min_grid=8):
    """Pick a lane-multiple batch tile: big enough to amortize the ~0.35us grid-step
    overhead, a multiple of CHUNK when chunking kicks in, and small enough that the
    grid keeps >= min_grid steps for large batches (v7x megacore sharding)."""
    lanes = LANE * pl.cdiv(B, LANE)            # batch padded to a lane multiple
    if lanes <= CHUNK:
        return lanes                            # single small tile, single chunk
    tile = min(max_tile, CHUNK * pl.cdiv(lanes, CHUNK))
    if lanes >= min_grid * CHUNK:
        per_step = CHUNK * pl.cdiv(pl.cdiv(lanes, min_grid), CHUNK)
        tile = min(tile, per_step)
    return tile


def simple_nn_forward(x, w1, b1, w2, b2, *, max_b_tile=32768):
    """x: (B, 2) f32. Params in PyTorch layout: w1 (64,2), b1 (64,), w2 (1,64), b2 (1,)."""
    B, in_features = x.shape
    hid = w1.shape[0]

    b_tile = _choose_b_tile(B, max_tile=max_b_tile)
    chunk = min(CHUNK, b_tile)
    n_chunks = b_tile // chunk
    Bp = pl.cdiv(B, b_tile) * b_tile

    # Pad in the already-transposed layout: (2, B) -> (2, Bp) along the lane axis.
    xT = x.astype(jnp.float32).T
    if Bp != B:
        xT = jnp.pad(xT, ((0, 0), (0, Bp - B)))

    w1f = w1.astype(jnp.float32)                       # (64, 2)
    b1_col = b1.reshape(hid, 1).astype(jnp.float32)    # (64, 1)
    w2_row = w2.reshape(1, hid).astype(jnp.float32)    # (1, 64)
    b2_s = b2.reshape(1, 1).astype(jnp.float32)        # (1, 1) -> SMEM

    kernel = functools.partial(mlp_kernel, chunk=chunk, n_chunks=n_chunks)

    outT = pl.pallas_call(
        kernel,
        out_shape=jax.ShapeDtypeStruct((1, Bp), jnp.float32),
        grid=(Bp // b_tile,),
        in_specs=[
            pl.BlockSpec((in_features, b_tile), lambda i: (0, i)),   # xT: tiled over batch
            pl.BlockSpec((hid, in_features), lambda i: (0, 0)),      # w1: resident
            pl.BlockSpec((hid, 1), lambda i: (0, 0)),                # b1: resident
            pl.BlockSpec((1, hid), lambda i: (0, 0)),                # w2 row: resident
            pl.BlockSpec(memory_space=pltpu.MemorySpace.SMEM),       # b2 scalar in SMEM
        ],
        out_specs=pl.BlockSpec((1, b_tile), lambda i: (0, i)),       # lane-dense output
        compiler_params=pltpu.CompilerParams(
            dimension_semantics=("parallel",),  # shard batch tiles across TCs on v7x
        ),
    )(xT, w1f, b1_col, w2_row, b2_s)

    # Padded lanes hold relu(b1)@w2+b2 garbage; reshape-based slice drops them.
    return outT[:, :B].reshape(B, 1)


def init_params(key):
    """Deterministic init mirroring nn.Linear's U(-1/sqrt(fan_in), 1/sqrt(fan_in)),
    stored in PyTorch layout: w (out_features, in_features)."""
    k1, k2, k3, k4 = jax.random.split(key, 4)
    in1, hid, out = 2, 64, 1
    bound1 = 1.0 / math.sqrt(in1)
    bound2 = 1.0 / math.sqrt(hid)
    w1 = jax.random.uniform(k1, (hid, in1), jnp.float32, -bound1, bound1)
    b1 = jax.random.uniform(k2, (hid,), jnp.float32, -bound1, bound1)
    w2 = jax.random.uniform(k3, (out, hid), jnp.float32, -bound2, bound2)
    b2 = jax.random.uniform(k4, (out,), jnp.float32, -bound2, bound2)
    return w1, b1, w2, b2


def _reference(x, w1, b1, w2, b2):
    # PyTorch semantics: y = relu(x @ W1^T + b1) @ W2^T + b2
    return jnp.maximum(x @ w1.T + b1, 0.0) @ w2.T + b2


if __name__ == "__main__":
    key = jax.random.PRNGKey(0)
    kx, kp, kx2 = jax.random.split(key, 3)
    w1, b1, w2, b2 = init_params(kp)

    # Small demo batch (single 128-lane tile, single chunk).
    B = 8
    x = jax.random.normal(kx, (B, 2), jnp.float32)
    out = jax.block_until_ready(simple_nn_forward(x, w1, b1, w2, b2))
    ref = _reference(x, w1, b1, w2, b2)
    assert out.shape == (B, 1)
    assert jnp.allclose(out, ref, atol=1e-5, rtol=1e-5)

    # Modest batch exercising the inner chunk loop, batch padding, and a multi-step grid.
    B2 = 5000
    x2 = jax.random.normal(kx2, (B2, 2), jnp.float32)
    out2 = jax.block_until_ready(simple_nn_forward(x2, w1, b1, w2, b2))
    ref2 = _reference(x2, w1, b1, w2, b2)
    assert out2.shape == (B2, 1)
    assert jnp.allclose(out2, ref2, atol=1e-5, rtol=1e-5)

    print("KERNEL_OK")
</pallas_src>

<mosaic_0001>
module attributes {stable_mosaic.version = 11 : i64} {
  func.func @mlp_kernel(%arg0: i32, %arg1: memref<2x128xf32, #tpu.memory_space<vmem>>, %arg2: memref<64x2xf32, #tpu.memory_space<vmem>>, %arg3: memref<64x1xf32, #tpu.memory_space<vmem>>, %arg4: memref<1x64xf32, #tpu.memory_space<vmem>>, %arg5: memref<1x1xf32, #tpu.memory_space<smem>>, %arg6: memref<1x128xf32, #tpu.memory_space<vmem>>) attributes {dimension_semantics = [#tpu.dimension_semantics<parallel>], iteration_bounds = array<i64: 1>, scalar_prefetch = 0 : i64, scratch_operands = 0 : i64, tpu.core_type = #tpu.core_type<tc>, window_params = [{transform_indices = @transform_0, window_bounds = array<i64: 2, 128>}, {pipeline_mode = #tpu.pipeline_mode<synchronous>, transform_indices = @transform_1, window_bounds = array<i64: 64, 2>}, {pipeline_mode = #tpu.pipeline_mode<synchronous>, transform_indices = @transform_2, window_bounds = array<i64: 64, 1>}, {pipeline_mode = #tpu.pipeline_mode<synchronous>, transform_indices = @transform_3, window_bounds = array<i64: 1, 64>}, {transform_indices = @transform_4, window_bounds = array<i64: 1, 1>}, {transform_indices = @transform_5, window_bounds = array<i64: 1, 128>}]} {
    %c0 = arith.constant 0 : index
    %c0_0 = arith.constant 0 : index
    %0 = vector.load %arg2[%c0, %c0_0] : memref<64x2xf32, #tpu.memory_space<vmem>>, vector<64x2xf32>
    %c0_1 = arith.constant 0 : index
    %c0_2 = arith.constant 0 : index
    %1 = vector.load %arg3[%c0_1, %c0_2] : memref<64x1xf32, #tpu.memory_space<vmem>>, vector<64x1xf32>
    %c0_3 = arith.constant 0 : index
    %c0_4 = arith.constant 0 : index
    %2 = vector.load %arg4[%c0_3, %c0_4] : memref<1x64xf32, #tpu.memory_space<vmem>>, vector<1x64xf32>
    %c0_5 = arith.constant 0 : index
    %c0_6 = arith.constant 0 : index
    %3 = memref.load %arg5[%c0_5, %c0_6] : memref<1x1xf32, #tpu.memory_space<smem>>
    %c0_i32 = arith.constant 0 : i32
    %c128_i32 = arith.constant 128 : i32
    %4 = arith.muli %c0_i32, %c128_i32 : i32
    %5 = tpu.assume_multiple %4, 128 : i32
    %c0_7 = arith.constant 0 : index
    %6 = arith.index_cast %5 : i32 to index
    %7 = vector.load %arg1[%c0_7, %6] : memref<2x128xf32, #tpu.memory_space<vmem>>, vector<2x128xf32>
    %cst = arith.constant dense<0.000000e+00> : vector<64x128xf32>
    %8 = tpu.matmul %0, %7, %cst {dimension_numbers = #tpu.dot_dimension_numbers<[1], [0], [0], [1], [0, 0, 1, 1], [], []>} : vector<64x2xf32>, vector<2x128xf32>, vector<64x128xf32> -> vector<64x128xf32>
    %9 = vector.broadcast %1 : vector<64x1xf32> to vector<64x128xf32>
    %10 = arith.addf %8, %9 : vector<64x128xf32>
    %cst_8 = arith.constant 0.000000e+00 : f32
    %11 = vector.broadcast %cst_8 : f32 to vector<64x128xf32>
    %12 = arith.maximumf %10, %11 : vector<64x128xf32>
    %cst_9 = arith.constant dense<0.000000e+00> : vector<1x128xf32>
    %13 = tpu.matmul %2, %12, %cst_9 {dimension_numbers = #tpu.dot_dimension_numbers<[1], [0], [0], [1], [0, 0, 1, 1], [], []>} : vector<1x64xf32>, vector<64x128xf32>, vector<1x128xf32> -> vector<1x128xf32>
    %14 = vector.broadcast %3 : f32 to vector<1x128xf32>
    %15 = arith.addf %13, %14 : vector<1x128xf32>
    %c0_10 = arith.constant 0 : index
    %16 = arith.index_cast %5 : i32 to index
    %17 = vector.load %arg6[%c0_10, %16] : memref<1x128xf32, #tpu.memory_space<vmem>>, vector<1x128xf32>
    tpu.vector_store %arg6[%c0_10, %16], %15 {strides = array<i32>} : memref<1x128xf32, #tpu.memory_space<vmem>>, vector<1x128xf32>,
    %c1_i32 = arith.constant 1 : i32
    return
  }
  func.func @transform_0(%arg0: i32) -> (i32, i32) {
    %c0_i32 = arith.constant 0 : i32
    %c0_i32_0 = arith.constant 0 : i32
    return %c0_i32, %arg0 : i32, i32
  }
  func.func @transform_1(%arg0: i32) -> (i32, i32) {
    %c0_i32 = arith.constant 0 : i32
    %c0_i32_0 = arith.constant 0 : i32
    %c0_i32_1 = arith.constant 0 : i32
    return %c0_i32, %c0_i32_0 : i32, i32
  }
  func.func @transform_2(%arg0: i32) -> (i32, i32) {
    %c0_i32 = arith.constant 0 : i32
    %c0_i32_0 = arith.constant 0 : i32
    %c0_i32_1 = arith.constant 0 : i32
    return %c0_i32, %c0_i32_0 : i32, i32
  }
  func.func @transform_3(%arg0: i32) -> (i32, i32) {
    %c0_i32 = arith.constant 0 : i32
    %c0_i32_0 = arith.constant 0 : i32
    %c0_i32_1 = arith.constant 0 : i32
    return %c0_i32, %c0_i32_0 : i32, i32
  }
  func.func @transform_4(%arg0: i32) -> (i32, i32) {
    %c0_i32 = arith.constant 0 : i32
    %c0_i32_0 = arith.constant 0 : i32
    %c0_i32_1 = arith.constant 0 : i32
    return %c0_i32, %c0_i32_0 : i32, i32
  }
  func.func @transform_5(%arg0: i32) -> (i32, i32) {
    %c0_i32 = arith.constant 0 : i32
    %c0_i32_0 = arith.constant 0 : i32
    return %c0_i32, %arg0 : i32, i32
  }
}

</mosaic_0001>

<llo_original>
// kernel: tpu_custom_call.1
$region0: #{tpu_custom_call.1}
  #allocation0 [shape = 'u32[]', space=smem, size = 0x4, offset = 0x4, fixed_abs, tag = 'smem constant byte address 0x4 - core index']
  #allocation1 [shape = 'u32[144,128]{1,0:T(1,128)}', space=vmem, size = 0x12000, scoped, tag = 'internal scratch']
  #allocation2 [shape = 'f32[1,1]{1,0:T(1,128)S(6)}', space=smem, size = 0x200, scoped, tag = 'scoped memory for tpu_custom_call.1']
  %s0 = inlined_call_operand.vmem [shape: f32[2,128], index: 0, kind: input, shape index: {}]
  %s1 = inlined_call_operand.vmem [shape: f32[64,2], index: 1, kind: input, shape index: {}]
  %s2 = inlined_call_operand.vmem [shape: f32[64,1], index: 2, kind: input, shape index: {}]
  %s3 = inlined_call_operand.vmem [shape: f32[1,64], index: 3, kind: input, shape index: {}]
  %s4 = inlined_call_operand.<no memory space> [shape: f32[1,1], index: 4, kind: input, shape index: {}]
  %s5 = inlined_call_operand.hbm [shape: f32[1,128], index: 5, kind: output, shape index: {}]
  %s6 = sld [smem:[#allocation0]]
  $region30: #{tpu_custom_call.1} parent=0
    _
  %s8 = ssub.s32 1, %s6
  %s9 = scalar_select 0, %s8, %s6
  %10 = sst [smem:[#allocation2]] %s4
  $region1: #{tpu_custom_call.1} parent=0
    #allocation3 [shape = 'u8[512]{0}', space=vmem, size = 0x400, scoped, tag = 'output window, operand 0, single buffered']
    #allocation4 [shape = 's32[1]{0}', space=sflag, size = 0x4, scoped, tag = 'scoped memory for tpu_custom_call.1']
    %11 = vsyncpa [#allocation4], 0
    // Predicated region
    $region2: #{tpu_custom_call.1} parent=1 // pred_check
      _
    $region3: #{tpu_custom_call.1} parent=1 // pred_check_branch
      %13 = sbr.rel (0) target = $region5
    $region4: #{tpu_custom_call.1} parent=1 // pred_region
      _
    $region5: #{tpu_custom_call.1} parent=1 // pred_fallthru
      _
    // Predicated region
    $region6: #{tpu_custom_call.1} parent=1 // pred_check
      _
    $region7: #{tpu_custom_call.1} parent=1 // pred_check_branch
      %15 = sbr.rel (0) target = $region9
    $region8: #{tpu_custom_call.1} parent=1 // pred_region
      _
    $region9: #{tpu_custom_call.1} parent=1 // pred_fallthru
      _
    // Predicated region
    $region10: #{tpu_custom_call.1} parent=1 // pred_check
      _
    $region11: #{tpu_custom_call.1} parent=1 // pred_check_branch
      %17 = sbr.rel (0) target = $region13
    $region12: #{tpu_custom_call.1} parent=1 // pred_region
      _
    $region13: #{tpu_custom_call.1} parent=1 // pred_fallthru
      _
    // Predicated region
    $region14: #{tpu_custom_call.1} parent=1 // pred_check
      _
    $region15: #{tpu_custom_call.1} parent=1 // pred_check_branch
      %19 = sbr.rel (0) target = $region17
    $region16: #{tpu_custom_call.1} parent=1 // pred_region
      _
    $region17: #{tpu_custom_call.1} parent=1 // pred_fallthru
      _
    // Predicated region
    $region18: #{tpu_custom_call.1} parent=1 // pred_check
      _
    $region19: #{tpu_custom_call.1} parent=1 // pred_check_branch
      %21 = sbr.rel (0) target = $region21
    $region20: #{tpu_custom_call.1} parent=1 // pred_region
      _
    $region21: #{tpu_custom_call.1} parent=1 // pred_fallthru
      _
    %v22 = vld [vmem:[%s1] sm:$0xff]
    %v23 = vld [vmem:[%s1 + $0x8] sm:$0xff]
    %v24 = vld [vmem:[%s1 + $0x10] sm:$0xff]
    %v25 = vld [vmem:[%s1 + $0x18] sm:$0xff]
    %v26 = vld [vmem:[%s1 + $0x20] sm:$0xff]
    %v27 = vld [vmem:[%s1 + $0x28] sm:$0xff]
    %v28 = vld [vmem:[%s1 + $0x30] sm:$0xff]
    %v29 = vld [vmem:[%s1 + $0x38] sm:$0xff]
    %v30 = vld [vmem:[%s2] sm:$0xff]
    %v31 = vld [vmem:[%s2 + $0x8] sm:$0xff]
    %v32 = vld [vmem:[%s2 + $0x10] sm:$0xff]
    %v33 = vld [vmem:[%s2 + $0x18] sm:$0xff]
    %v34 = vld [vmem:[%s2 + $0x20] sm:$0xff]
    %v35 = vld [vmem:[%s2 + $0x28] sm:$0xff]
    %v36 = vld [vmem:[%s2 + $0x30] sm:$0xff]
    %v37 = vld [vmem:[%s2 + $0x38] sm:$0xff]
    %v38 = vld [vmem:[%s3] sm:$0x1]
    %s39 = sld [smem:[#allocation2]]
    %v40 = vld [vmem:[%s0] sm:$0x3]
    %42 = vset.pattern.permute.xlu0 0
    %43 = vperm.xlu0 %42, %v30
    %v44 = vpop.permute.xlu0 %43
    %47 = vset.pattern.permute.xlu0 0
    %48 = vperm.xlu0 %47, %v31
    %v49 = vpop.permute.xlu0 %48
    %52 = vset.pattern.permute.xlu0 0
    %53 = vperm.xlu0 %52, %v32
    %v54 = vpop.permute.xlu0 %53
    %57 = vset.pattern.permute.xlu0 0
    %58 = vperm.xlu0 %57, %v33
    %v59 = vpop.permute.xlu0 %58
    %62 = vset.pattern.permute.xlu0 0
    %63 = vperm.xlu0 %62, %v34
    %v64 = vpop.permute.xlu0 %63
    %67 = vset.pattern.permute.xlu0 0
    %68 = vperm.xlu0 %67, %v35
    %v69 = vpop.permute.xlu0 %68
    %72 = vset.pattern.permute.xlu0 0
    %73 = vperm.xlu0 %72, %v36
    %v74 = vpop.permute.xlu0 %73
    %77 = vset.pattern.permute.xlu0 0
    %78 = vperm.xlu0 %77, %v37
    %v79 = vpop.permute.xlu0 %78
    %vm81 = vcmask 15360
    %v83 = vsel %vm81, %v22, 0
    %v86 = vsel %vm81, %v23, 0
    %v89 = vsel %vm81, %v24, 0
    %v92 = vsel %vm81, %v25, 0
    %v95 = vsel %vm81, %v26, 0
    %v98 = vsel %vm81, %v27, 0
    %v101 = vsel %vm81, %v28, 0
    %v104 = vsel %vm81, %v29, 0
    %vm106 = vcmask 1041408
    %v108 = vsel %vm106, %v40, 0
    %110 = vmatprep.subr.mxu0 0.0
    %111 = vmatpush1.msra.mxu0 %v108
    %112 = vmatprep.subr.mxu0 0.0
    %113 = vmatpush1.msra.mxu0 0.0
    %114 = vmatprep.subr.mxu0 0.0
    %115 = vmatpush1.msra.mxu0 0.0
    %116 = vmatprep.subr.mxu0 0.0
    %117 = vmatpush1.msra.mxu0 0.0
    %118 = vmatprep.subr.mxu0 0.0
    %119 = vmatpush1.msra.mxu0 0.0
    %120 = vmatprep.subr.mxu0 0.0
    %121 = vmatpush1.msra.mxu0 0.0
    %122 = vmatprep.subr.mxu0 0.0
    %123 = vmatpush1.msra.mxu0 0.0
    %124 = vmatprep.subr.mxu0 0.0
    %125 = vmatpush1.msra.mxu0 0.0
    %126 = vmatprep.subr.mxu0 0.0
    %127 = vmatpush1.msra.mxu0 0.0
    %128 = vmatprep.subr.mxu0 0.0
    %129 = vmatpush1.msra.mxu0 0.0
    %130 = vmatprep.subr.mxu0 0.0
    %131 = vmatpush1.msra.mxu0 0.0
    %132 = vmatprep.subr.mxu0 0.0
    %133 = vmatpush1.msra.mxu0 0.0
    %134 = vmatprep.subr.mxu0 0.0
    %135 = vmatpush1.msra.mxu0 0.0
    %136 = vmatprep.subr.mxu0 0.0
    %137 = vmatpush1.msra.mxu0 0.0
    %138 = vmatprep.subr.mxu0 0.0
    %139 = vmatpush1.msra.mxu0 0.0
    %140 = vmatprep.subr.mxu0 0.0
    %141 = vmatpush1.msra.mxu0 0.0
    %142 = vmatprep.subr.mxu0 0.0
    %143 = vmatpush1.msra.mxu0 0.0
    %144 = vmatprep.subr.mxu0 0.0
    %145 = vmatpush1.msra.mxu0 0.0
    %146 = vmatprep.subr.mxu0 0.0
    %147 = vmatpush1.msra.mxu0 0.0
    %148 = vmatprep.subr.mxu0 0.0
    %149 = vmatpush1.msra.mxu0 0.0
    %150 = vmatprep.subr.mxu0 0.0
    %151 = vmatpush1.msra.mxu0 0.0
    %152 = vmatprep.subr.mxu0 0.0
    %153 = vmatpush1.msra.mxu0 0.0
    %154 = vmatprep.subr.mxu0 0.0
    %155 = vmatpush1.msra.mxu0 0.0
    %156 = vmatprep.subr.mxu0 0.0
    %157 = vmatpush1.msra.mxu0 0.0
    %158 = vmatprep.subr.mxu0 0.0
    %159 = vmatpush1.msra.mxu0 0.0
    %160 = vmatprep.subr.mxu0 0.0
    %161 = vmatpush1.msra.mxu0 0.0
    %162 = vmatprep.subr.mxu0 0.0
    %163 = vmatpush1.msra.mxu0 0.0
    %164 = vmatprep.subr.mxu0 0.0
    %165 = vmatpush1.msra.mxu0 0.0
    %166 = vmatprep.subr.mxu0 0.0
    %167 = vmatpush1.msra.mxu0 0.0
    %168 = vmatprep.subr.mxu0 0.0
    %169 = vmatpush1.msra.mxu0 0.0
    %170 = vmatprep.subr.mxu0 0.0
    %171 = vmatpush1.msra.mxu0 0.0
    %172 = vmatprep.subr.mxu0 0.0
    %173 = vmatpush1.msra.mxu0 0.0
    %174 = vmatprep.mubr.f32.mxu0 0.0
    %175 = vmatmul.mubr.f32.gmra.mrb[0].mxu0 %v83
    %v176 = vpop.f32.mrb[0].mxu0
    %v177 = vadd.f32 %v44, %v176
    %v178 = vpop.f32.mrb[0].mxu0
    %179 = vmatprep.mubr.f32.mxu0 0.0
    %180 = vmatmul.mubr.f32.gmra.mrb[0].mxu0 %v86
    %v181 = vpop.f32.mrb[0].mxu0
    %v182 = vadd.f32 %v49, %v181
    %v183 = vpop.f32.mrb[0].mxu0
    %184 = vmatprep.mubr.f32.mxu0 0.0
    %185 = vmatmul.mubr.f32.gmra.mrb[0].mxu0 %v89
    %v186 = vpop.f32.mrb[0].mxu0
    %v187 = vadd.f32 %v54, %v186
    %v188 = vpop.f32.mrb[0].mxu0
    %189 = vmatprep.mubr.f32.mxu0 0.0
    %190 = vmatmul.mubr.f32.gmra.mrb[0].mxu0 %v92
    %v191 = vpop.f32.mrb[0].mxu0
    %v192 = vadd.f32 %v59, %v191
    %v193 = vpop.f32.mrb[0].mxu0
    %194 = vmatprep.mubr.f32.mxu0 0.0
    %195 = vmatmul.mubr.f32.gmra.mrb[0].mxu0 %v95
    %v196 = vpop.f32.mrb[0].mxu0
    %v197 = vadd.f32 %v64, %v196
    %v198 = vpop.f32.mrb[0].mxu0
    %199 = vmatprep.mubr.f32.mxu0 0.0
    %200 = vmatmul.mubr.f32.gmra.mrb[0].mxu0 %v98
    %v201 = vpop.f32.mrb[0].mxu0
    %v202 = vadd.f32 %v69, %v201
    %v203 = vpop.f32.mrb[0].mxu0
    %204 = vmatprep.mubr.f32.mxu0 0.0
    %205 = vmatmul.mubr.f32.gmra.mrb[0].mxu0 %v101
    %v206 = vpop.f32.mrb[0].mxu0
    %v207 = vadd.f32 %v74, %v206
    %v208 = vpop.f32.mrb[0].mxu0
    %209 = vmatprep.mubr.f32.mxu0 0.0
    %210 = vmatmul.mubr.f32.gmra.mrb[0].mxu0 %v104
    %v211 = vpop.f32.mrb[0].mxu0
    %v212 = vadd.f32 %v79, %v211
    %v213 = vpop.f32.mrb[0].mxu0
    %214 = vdwg.mxu0
    %v215 = vmax.f32 %v177, 0.0
    %v216 = vmax.f32 %v182, 0.0
    %v217 = vmax.f32 %v187, 0.0
    %v218 = vmax.f32 %v192, 0.0
    %v219 = vmax.f32 %v197, 0.0
    %v220 = vmax.f32 %v202, 0.0
    %v221 = vmax.f32 %v207, 0.0
    %v222 = vmax.f32 %v212, 0.0
    %v223 = vstv %s39
    %vm224 = vcmask 523264
    %v226 = vsel %vm224, %v38, 0
    %228 = vmatprep.subr.mxu0 0.0
    %229 = vmatpush1.msra.mxu0 %v215
    %230 = vmatprep.subr.mxu0 0.0
    %231 = vmatpush1.msra.mxu0 %v216
    %232 = vmatprep.subr.mxu0 0.0
    %233 = vmatpush1.msra.mxu0 %v217
    %234 = vmatprep.subr.mxu0 0.0
    %235 = vmatpush1.msra.mxu0 %v218
    %236 = vmatprep.subr.mxu0 0.0
    %237 = vmatpush1.msra.mxu0 %v219
    %238 = vmatprep.subr.mxu0 0.0
    %239 = vmatpush1.msra.mxu0 %v220
    %240 = vmatprep.subr.mxu0 0.0
    %241 = vmatpush1.msra.mxu0 %v221
    %242 = vmatprep.subr.mxu0 0.0
    %243 = vmatpush1.msra.mxu0 %v222
    %244 = vmatprep.subr.mxu0 0.0
    %245 = vmatpush1.msra.mxu0 0.0
    %246 = vmatprep.subr.mxu0 0.0
    %247 = vmatpush1.msra.mxu0 0.0
    %248 = vmatprep.subr.mxu0 0.0
    %249 = vmatpush1.msra.mxu0 0.0
    %250 = vmatprep.subr.mxu0 0.0
    %251 = vmatpush1.msra.mxu0 0.0
    %252 = vmatprep.subr.mxu0 0.0
    %253 = vmatpush1.msra.mxu0 0.0
    %254 = vmatprep.subr.mxu0 0.0
    %255 = vmatpush1.msra.mxu0 0.0
    %256 = vmatprep.subr.mxu0 0.0
    %257 = vmatpush1.msra.mxu0 0.0
    %258 = vmatprep.subr.mxu0 0.0
    %259 = vmatpush1.msra.mxu0 0.0
    %260 = vmatprep.subr.mxu0 0.0
    %261 = vmatpush1.msra.mxu0 0.0
    %262 = vmatprep.subr.mxu0 0.0
    %263 = vmatpush1.msra.mxu0 0.0
    %264 = vmatprep.subr.mxu0 0.0
    %265 = vmatpush1.msra.mxu0 0.0
    %266 = vmatprep.subr.mxu0 0.0
    %267 = vmatpush1.msra.mxu0 0.0
    %268 = vmatprep.subr.mxu0 0.0
    %269 = vmatpush1.msra.mxu0 0.0
    %270 = vmatprep.subr.mxu0 0.0
    %271 = vmatpush1.msra.mxu0 0.0
    %272 = vmatprep.subr.mxu0 0.0
    %273 = vmatpush1.msra.mxu0 0.0
    %274 = vmatprep.subr.mxu0 0.0
    %275 = vmatpush1.msra.mxu0 0.0
    %276 = vmatprep.subr.mxu0 0.0
    %277 = vmatpush1.msra.mxu0 0.0
    %278 = vmatprep.subr.mxu0 0.0
    %279 = vmatpush1.msra.mxu0 0.0
    %280 = vmatprep.subr.mxu0 0.0
    %281 = vmatpush1.msra.mxu0 0.0
    %282 = vmatprep.subr.mxu0 0.0
    %283 = vmatpush1.msra.mxu0 0.0
    %284 = vmatprep.subr.mxu0 0.0
    %285 = vmatpush1.msra.mxu0 0.0
    %286 = vmatprep.subr.mxu0 0.0
    %287 = vmatpush1.msra.mxu0 0.0
    %288 = vmatprep.subr.mxu0 0.0
    %289 = vmatpush1.msra.mxu0 0.0
    %290 = vmatprep.subr.mxu0 0.0
    %291 = vmatpush1.msra.mxu0 0.0
    %292 = vmatprep.mubr.f32.mxu0 0.0
    %293 = vmatmul.mubr.f32.gmra.mrb[0].mxu0 %v226
    %v294 = vpop.f32.mrb[0].mxu0
    %v295 = vadd.f32 %v223, %v294
    %v296 = vpop.f32.mrb[0].mxu0
    %297 = vdwg.mxu0
    %298 = vst [vmem:[#allocation3] sm:$0x1] %v295
    // Predicated region
    $region22: #{tpu_custom_call.1} parent=1 // pred_check
      _
    $region23: #{tpu_custom_call.1} parent=1 // pred_check_branch
      %300 = sbr.rel (0) target = $region25
    $region24: #{tpu_custom_call.1} parent=1 // pred_region
      %s302 = ssub.s32 16, 16
      %303 = vsyncadd [#allocation4], %s302
      %s305 = sshll.u32 [#allocation3], 4
      %s306 = int_to_ptr.vmem [resolvable:$true] %s305
      %308 = dma.vmem_to_hbm [thread:$0]  %s306, 16, %s5, [#allocation4]
    $region25: #{tpu_custom_call.1} parent=1 // pred_fallthru
      _
    // Predicated region
    $region26: #{tpu_custom_call.1} parent=1 // pred_check
      _
    $region27: #{tpu_custom_call.1} parent=1 // pred_check_branch
      %310 = sbr.rel (0) target = $region29
    $region28: #{tpu_custom_call.1} parent=1 // pred_region
      %311 = dma.done [#allocation4], 16
    $region29: #{tpu_custom_call.1} parent=1 // pred_fallthru
      _
    %312 = vsyncpa [#allocation4], 1

</llo_original>
